<compile_context>
chip_gen: v5e
topology: v5e:2x2
jax: 0.10.0
libtpu: 0.0.40
codegen_flags: <defaults>
</compile_context>

<pallas_src>
import functools

import jax
import jax.numpy as jnp
from jax.experimental import pallas as pl
from jax.experimental.pallas import tpu as pltpu


def _seg_head_kernel(x_ref, w3_ref, shift_ref, w1_ref, b1_ref, out_ref):
    # x_ref:     (1, TH+2, W+2, Cin) bf16  -- halo row tile (spatially pre-padded)
    # w3_ref:    (9*Cin, Cmid)       bf16  -- 3x3 weights (BN scale folded in),
    #                                         channel order = (dh*3+dw)*Cin + c
    # shift_ref: (1, Cmid)           f32   -- folded BN shift = beta - mean*scale
    # w1_ref:    (Cmid, Cout_pad)    bf16  -- 1x1 conv weights (lane-padded)
    # b1_ref:    (1, Cout_pad)       f32   -- 1x1 conv bias (lane-padded)
    # out_ref:   (1, TH, W, Cout_pad) f32
    th = out_ref.shape[1]
    w = out_ref.shape[2]
    cin = x_ref.shape[-1]

    xp = x_ref[0]  # (TH+2, W+2, Cin) bf16

    # dw (column) taps concatenated along channels: (TH+2, W, 3*Cin)
    xw = jnp.concatenate(
        [xp[:, 0:w, :], xp[:, 1:w + 1, :], xp[:, 2:w + 2, :]], axis=-1)
    # dh (row) taps concatenated along channels: (TH, W, 9*Cin)
    x9 = jnp.concatenate([xw[0:th], xw[1:th + 1], xw[2:th + 2]], axis=-1)

    # 3x3 conv (+ folded BN scale) as a single MXU matmul with K = 9*Cin.
    lhs = x9.reshape(th * w, 9 * cin)
    acc = jnp.dot(lhs, w3_ref[...], preferred_element_type=jnp.float32)

    # BN shift + ReLU in f32.
    feat = jnp.maximum(acc + shift_ref[0], 0.0)

    # 1x1 conv (matmul over channels) + bias; output lane-padded to 128k.
    out = jnp.dot(feat.astype(jnp.bfloat16), w1_ref[...],
                  preferred_element_type=jnp.float32) + b1_ref[0]

    out_ref[0] = out.reshape(th, w, -1).astype(out_ref.dtype)


def _pick_tile_h(H, W, cin, cmid, cout_pad, budget_bytes=10 * 1024 * 1024):
    """Largest divisor of H whose double-buffered working set fits the budget."""
    best = 1
    for th in range(1, H + 1):
        if H % th:
            continue
        in_tile = (th + 2) * (W + 2) * cin * 2           # bf16 input tile
        out_tile = th * W * cout_pad * 4                 # f32 output tile
        tmp = th * W * (12 * cin * 2 + 2 * cmid * 4 + cout_pad * 4)
        if 2 * (in_tile + out_tile) + tmp <= budget_bytes:
            best = th
    return best


def segment_head_forward(x_nchw, params, up_factor, n_classes, eps=1e-5,
                         tile_h=None):
    """SegmentHead forward. x_nchw: (N, Cin, H, W) f32.

    Returns (N, n_classes, H*up_factor, W*up_factor), matching PyTorch."""
    w3_oihw = params["conv_w"]        # (Cmid, Cin, 3, 3)
    gamma = params["bn_gamma"]        # (Cmid,)
    beta = params["bn_beta"]          # (Cmid,)
    mean = params["bn_mean"]          # (Cmid,)
    var = params["bn_var"]            # (Cmid,)
    w1_oihw = params["conv_out_w"]    # (Cout, Cmid, 1, 1)
    b1 = params["conv_out_b"]         # (Cout,)

    N, cin, H, W = x_nchw.shape
    cmid = w3_oihw.shape[0]
    cout = w1_oihw.shape[0]
    assert cout == n_classes * up_factor * up_factor

    # Lane-dense output: pad Cout up to a multiple of 128.
    cout_pad = ((cout + 127) // 128) * 128

    if tile_h is None:
        tile_h = _pick_tile_h(H, W, cin, cmid, cout_pad)
    assert H % tile_h == 0, (H, tile_h)
    num_h = H // tile_h

    # --- parameter / layout glue (plain JAX) ---
    # Fold BN into the conv weights (scale) + a shift vector.
    scale = gamma / jnp.sqrt(var + eps)
    shift = beta - mean * scale
    # (Cmid, Cin, 3, 3) -> (3, 3, Cin, Cmid) -> (9*Cin, Cmid), scale folded in.
    w3_k = jnp.transpose(w3_oihw, (2, 3, 1, 0)).reshape(9 * cin, cmid)
    w3_k = (w3_k * scale[None, :]).astype(jnp.bfloat16)
    shift_k = shift.reshape(1, cmid).astype(jnp.float32)
    # (Cout, Cmid, 1, 1) -> (Cmid, Cout) -> lane-pad to Cout_pad.
    w1_k = jnp.transpose(w1_oihw[:, :, 0, 0], (1, 0))
    w1_k = jnp.pad(w1_k, ((0, 0), (0, cout_pad - cout))).astype(jnp.bfloat16)
    b1_k = jnp.pad(b1, (0, cout_pad - cout)).reshape(1, cout_pad).astype(jnp.float32)

    # NCHW -> NHWC (bf16 to halve activation HBM bytes), pad by 1, and slice
    # into row tiles of TH+2 rows (1-row halo on each side, duplicated).
    x_nhwc = jnp.transpose(x_nchw, (0, 2, 3, 1)).astype(jnp.bfloat16)
    x_pad = jnp.pad(x_nhwc, ((0, 0), (1, 1), (1, 1), (0, 0)))
    row_idx = jnp.arange(num_h)[:, None] * tile_h + jnp.arange(tile_h + 2)[None, :]
    x_tiles = x_pad[:, row_idx].reshape(N * num_h, tile_h + 2, W + 2, cin)

    # --- Pallas call: grid over (batch, row-tile), both parallel ---
    out_pad = pl.pallas_call(
        _seg_head_kernel,
        out_shape=jax.ShapeDtypeStruct((N, H, W, cout_pad), jnp.float32),
        grid=(N, num_h),
        in_specs=[
            pl.BlockSpec((1, tile_h + 2, W + 2, cin),
                         lambda n, h: (n * num_h + h, 0, 0, 0)),
            pl.BlockSpec((9 * cin, cmid), lambda n, h: (0, 0)),
            pl.BlockSpec((1, cmid), lambda n, h: (0, 0)),
            pl.BlockSpec((cmid, cout_pad), lambda n, h: (0, 0)),
            pl.BlockSpec((1, cout_pad), lambda n, h: (0, 0)),
        ],
        out_specs=pl.BlockSpec((1, tile_h, W, cout_pad),
                               lambda n, h: (n, h, 0, 0)),
        compiler_params=pltpu.CompilerParams(
            dimension_semantics=("parallel", "parallel"),
            vmem_limit_bytes=32 * 1024 * 1024),
    )(x_tiles, w3_k, shift_k, w1_k, b1_k)

    # --- PixelShuffle(up_factor) glue: drop lane padding, NHWC -> NCHW ---
    # TODO(synk): the pixel-shuffle transpose is left to XLA as a post-pass;
    # folding it into the consumer (or emitting bf16) would save one HBM trip.
    r = up_factor
    y = out_pad[..., :cout].reshape(N, H, W, n_classes, r, r)
    y = jnp.transpose(y, (0, 3, 1, 4, 2, 5))        # (N, C, H, r, W, r)
    y = y.reshape(N, n_classes, H * r, W * r)
    return y


def _reference_forward(x_nchw, params, up_factor, n_classes, eps=1e-5):
    """Pure-JAX f32 reference (mirrors the PyTorch module in eval mode)."""
    y = jax.lax.conv_general_dilated(
        x_nchw, params["conv_w"], window_strides=(1, 1),
        padding=((1, 1), (1, 1)),
        dimension_numbers=("NCHW", "OIHW", "NCHW"))
    g = params["bn_gamma"][None, :, None, None]
    b = params["bn_beta"][None, :, None, None]
    m = params["bn_mean"][None, :, None, None]
    v = params["bn_var"][None, :, None, None]
    y = (y - m) / jnp.sqrt(v + eps) * g + b
    y = jnp.maximum(y, 0.0)
    y = jax.lax.conv_general_dilated(
        y, params["conv_out_w"], window_strides=(1, 1), padding="VALID",
        dimension_numbers=("NCHW", "OIHW", "NCHW"))
    y = y + params["conv_out_b"][None, :, None, None]
    N, C, H, W = y.shape
    r = up_factor
    y = y.reshape(N, n_classes, r, r, H, W)
    y = jnp.transpose(y, (0, 1, 4, 2, 5, 3))
    return y.reshape(N, n_classes, H * r, W * r)


if __name__ == "__main__":
    # Small, module-consistent shapes.
    N, Cin, H, W = 2, 4, 16, 16
    Cmid, n_classes, up_factor = 8, 3, 2
    Cout = n_classes * up_factor ** 2

    key = jax.random.PRNGKey(0)
    k = jax.random.split(key, 8)
    params = {
        "conv_w": jax.random.normal(k[0], (Cmid, Cin, 3, 3), jnp.float32) * 0.1,
        "bn_gamma": 1.0 + 0.1 * jax.random.normal(k[1], (Cmid,), jnp.float32),
        "bn_beta": 0.1 * jax.random.normal(k[2], (Cmid,), jnp.float32),
        "bn_mean": 0.05 * jax.random.normal(k[3], (Cmid,), jnp.float32),
        "bn_var": jnp.abs(1.0 + 0.1 * jax.random.normal(k[4], (Cmid,), jnp.float32)),
        "conv_out_w": jax.random.normal(k[5], (Cout, Cmid, 1, 1), jnp.float32) * 0.1,
        "conv_out_b": 0.1 * jax.random.normal(k[6], (Cout,), jnp.float32),
    }
    x = jax.random.normal(k[7], (N, Cin, H, W), jnp.float32)

    # TODO(synk): BatchNorm uses inference (running-stats) semantics; PyTorch
    # training-mode batch statistics are not reproduced.
    fwd = jax.jit(functools.partial(segment_head_forward,
                                    up_factor=up_factor,
                                    n_classes=n_classes,
                                    tile_h=8))   # tile_h=8 -> 2 row tiles/image
    out = fwd(x, params)
    out = jax.block_until_ready(out)

    ref = _reference_forward(x, params, up_factor, n_classes)
    assert out.shape == (N, n_classes, H * up_factor, W * up_factor), out.shape
    # bf16 MXU operands with f32 accumulation -> loosened tolerance.
    assert jnp.allclose(out, ref, atol=1e-2, rtol=1e-2), \
        float(jnp.max(jnp.abs(out - ref)))

    print("KERNEL_OK")
</pallas_src>

<mosaic_0001>
module attributes {stable_mosaic.version = 11 : i64} {
  func.func @_seg_head_kernel(%arg0: i32, %arg1: i32, %arg2: memref<1x10x18x4xbf16, #tpu.memory_space<vmem>>, %arg3: memref<36x8xbf16, #tpu.memory_space<vmem>>, %arg4: memref<1x8xf32, #tpu.memory_space<vmem>>, %arg5: memref<8x128xbf16, #tpu.memory_space<vmem>>, %arg6: memref<1x128xf32, #tpu.memory_space<vmem>>, %arg7: memref<1x8x16x128xf32, #tpu.memory_space<vmem>>) attributes {dimension_semantics = [#tpu.dimension_semantics<parallel>, #tpu.dimension_semantics<parallel>], iteration_bounds = array<i64: 2, 2>, scalar_prefetch = 0 : i64, scratch_operands = 0 : i64, tpu.core_type = #tpu.core_type<tc>, window_params = [{transform_indices = @transform_0, window_bounds = array<i64: 1, 10, 18, 4>}, {pipeline_mode = #tpu.pipeline_mode<synchronous>, transform_indices = @transform_1, window_bounds = array<i64: 36, 8>}, {pipeline_mode = #tpu.pipeline_mode<synchronous>, transform_indices = @transform_2, window_bounds = array<i64: 1, 8>}, {pipeline_mode = #tpu.pipeline_mode<synchronous>, transform_indices = @transform_3, window_bounds = array<i64: 8, 128>}, {pipeline_mode = #tpu.pipeline_mode<synchronous>, transform_indices = @transform_4, window_bounds = array<i64: 1, 128>}, {transform_indices = @transform_5, window_bounds = array<i64: 1, 8, 16, 128>}]} {
    %c0 = arith.constant 0 : index
    %c0_0 = arith.constant 0 : index
    %c0_1 = arith.constant 0 : index
    %c0_2 = arith.constant 0 : index
    %0 = vector.load %arg2[%c0, %c0_0, %c0_1, %c0_2] : memref<1x10x18x4xbf16, #tpu.memory_space<vmem>>, vector<1x10x18x4xbf16>
    %1 = vector.shape_cast %0 : vector<1x10x18x4xbf16> to vector<10x18x4xbf16>
    %2 = vector.extract_strided_slice %1 {offsets = [0, 0, 0], sizes = [10, 16, 4], strides = [1, 1, 1]} : vector<10x18x4xbf16> to vector<10x16x4xbf16>
    %3 = vector.extract_strided_slice %1 {offsets = [0, 1, 0], sizes = [10, 16, 4], strides = [1, 1, 1]} : vector<10x18x4xbf16> to vector<10x16x4xbf16>
    %4 = vector.extract_strided_slice %1 {offsets = [0, 2, 0], sizes = [10, 16, 4], strides = [1, 1, 1]} : vector<10x18x4xbf16> to vector<10x16x4xbf16>
    %5 = tpu.concatenate %2, %3, %4 in 2 : vector<10x16x4xbf16>, vector<10x16x4xbf16>, vector<10x16x4xbf16> -> vector<10x16x12xbf16>
    %6 = vector.extract_strided_slice %5 {offsets = [0, 0, 0], sizes = [8, 16, 12], strides = [1, 1, 1]} : vector<10x16x12xbf16> to vector<8x16x12xbf16>
    %7 = vector.extract_strided_slice %5 {offsets = [1, 0, 0], sizes = [8, 16, 12], strides = [1, 1, 1]} : vector<10x16x12xbf16> to vector<8x16x12xbf16>
    %8 = vector.extract_strided_slice %5 {offsets = [2, 0, 0], sizes = [8, 16, 12], strides = [1, 1, 1]} : vector<10x16x12xbf16> to vector<8x16x12xbf16>
    %9 = tpu.concatenate %6, %7, %8 in 2 : vector<8x16x12xbf16>, vector<8x16x12xbf16>, vector<8x16x12xbf16> -> vector<8x16x36xbf16>
    %10 = vector.shape_cast %9 : vector<8x16x36xbf16> to vector<128x36xbf16>
    %c0_3 = arith.constant 0 : index
    %c0_4 = arith.constant 0 : index
    %11 = vector.load %arg3[%c0_3, %c0_4] : memref<36x8xbf16, #tpu.memory_space<vmem>>, vector<36x8xbf16>
    %cst = arith.constant dense<0.000000e+00> : vector<128x8xf32>
    %12 = tpu.matmul %10, %11, %cst {dimension_numbers = #tpu.dot_dimension_numbers<[1], [0], [0], [1], [0, 0, 1, 1], [], []>} : vector<128x36xbf16>, vector<36x8xbf16>, vector<128x8xf32> -> vector<128x8xf32>
    %c0_5 = arith.constant 0 : index
    %c0_6 = arith.constant 0 : index
    %13 = vector.load %arg4[%c0_5, %c0_6] : memref<1x8xf32, #tpu.memory_space<vmem>>, vector<1x8xf32>
    %14 = vector.shape_cast %13 : vector<1x8xf32> to vector<8xf32>
    %15 = vector.shape_cast %14 : vector<8xf32> to vector<1x8xf32>
    %16 = vector.broadcast %15 : vector<1x8xf32> to vector<128x8xf32>
    %17 = arith.addf %12, %16 : vector<128x8xf32>
    %cst_7 = arith.constant 0.000000e+00 : f32
    %18 = vector.broadcast %cst_7 : f32 to vector<128x8xf32>
    %19 = arith.maximumf %17, %18 : vector<128x8xf32>
    %20 = arith.truncf %19 : vector<128x8xf32> to vector<128x8xbf16>
    %c0_8 = arith.constant 0 : index
    %c0_9 = arith.constant 0 : index
    %21 = vector.load %arg5[%c0_8, %c0_9] : memref<8x128xbf16, #tpu.memory_space<vmem>>, vector<8x128xbf16>
    %cst_10 = arith.constant dense<0.000000e+00> : vector<128x128xf32>
    %22 = tpu.matmul %20, %21, %cst_10 {dimension_numbers = #tpu.dot_dimension_numbers<[1], [0], [0], [1], [0, 0, 1, 1], [], []>} : vector<128x8xbf16>, vector<8x128xbf16>, vector<128x128xf32> -> vector<128x128xf32>
    %c0_11 = arith.constant 0 : index
    %c0_12 = arith.constant 0 : index
    %23 = vector.load %arg6[%c0_11, %c0_12] : memref<1x128xf32, #tpu.memory_space<vmem>>, vector<1x128xf32>
    %24 = vector.shape_cast %23 : vector<1x128xf32> to vector<128xf32>
    %25 = vector.shape_cast %24 : vector<128xf32> to vector<1x128xf32>
    %26 = vector.broadcast %25 : vector<1x128xf32> to vector<128x128xf32>
    %27 = arith.addf %22, %26 : vector<128x128xf32>
    %28 = vector.shape_cast %27 : vector<128x128xf32> to vector<8x16x128xf32>
    %c0_13 = arith.constant 0 : index
    %c0_14 = arith.constant 0 : index
    %c0_15 = arith.constant 0 : index
    %c0_16 = arith.constant 0 : index
    %29 = vector.load %arg7[%c0_13, %c0_14, %c0_15, %c0_16] : memref<1x8x16x128xf32, #tpu.memory_space<vmem>>, vector<1x8x16x128xf32>
    %30 = vector.shape_cast %29 : vector<1x8x16x128xf32> to vector<8x16x128xf32>
    %31 = vector.shape_cast %28 : vector<8x16x128xf32> to vector<1x8x16x128xf32>
    tpu.vector_store %arg7[%c0_13, %c0_14, %c0_15, %c0_16], %31 {strides = array<i32>} : memref<1x8x16x128xf32, #tpu.memory_space<vmem>>, vector<1x8x16x128xf32>,
    return
  }
  func.func @transform_0(%arg0: i32, %arg1: i32) -> (i32, i32, i32, i32) {
    %c2_i32 = arith.constant 2 : i32
    %0 = arith.muli %arg0, %c2_i32 : i32
    %1 = arith.addi %0, %arg1 : i32
    %c0_i32 = arith.constant 0 : i32
    %c0_i32_0 = arith.constant 0 : i32
    %c0_i32_1 = arith.constant 0 : i32
    %c0_i32_2 = arith.constant 0 : i32
    return %1, %c0_i32, %c0_i32_0, %c0_i32_1 : i32, i32, i32, i32
  }
  func.func @transform_1(%arg0: i32, %arg1: i32) -> (i32, i32) {
    %c0_i32 = arith.constant 0 : i32
    %c0_i32_0 = arith.constant 0 : i32
    %c0_i32_1 = arith.constant 0 : i32
    return %c0_i32, %c0_i32_0 : i32, i32
  }
  func.func @transform_2(%arg0: i32, %arg1: i32) -> (i32, i32) {
    %c0_i32 = arith.constant 0 : i32
    %c0_i32_0 = arith.constant 0 : i32
    %c0_i32_1 = arith.constant 0 : i32
    return %c0_i32, %c0_i32_0 : i32, i32
  }
  func.func @transform_3(%arg0: i32, %arg1: i32) -> (i32, i32) {
    %c0_i32 = arith.constant 0 : i32
    %c0_i32_0 = arith.constant 0 : i32
    %c0_i32_1 = arith.constant 0 : i32
    return %c0_i32, %c0_i32_0 : i32, i32
  }
  func.func @transform_4(%arg0: i32, %arg1: i32) -> (i32, i32) {
    %c0_i32 = arith.constant 0 : i32
    %c0_i32_0 = arith.constant 0 : i32
    %c0_i32_1 = arith.constant 0 : i32
    return %c0_i32, %c0_i32_0 : i32, i32
  }
  func.func @transform_5(%arg0: i32, %arg1: i32) -> (i32, i32, i32, i32) {
    %c0_i32 = arith.constant 0 : i32
    %c0_i32_0 = arith.constant 0 : i32
    %c0_i32_1 = arith.constant 0 : i32
    return %arg0, %arg1, %c0_i32, %c0_i32_0 : i32, i32, i32, i32
  }
}

</mosaic_0001>

<llo_original>
// kernel: segment_head_forward.1
$region0: #{segment_head_forward.1}
  #allocation0 [shape = 'u32[]', space=smem, size = 0x4, offset = 0x4, fixed_abs, tag = 'smem constant byte address 0x4 - core index']
  #allocation1 [shape = 'u32[72,128]{1,0:T(1,128)}', space=vmem, size = 0x9000, scoped, tag = 'internal scratch']
  %s0 = inlined_call_operand.vmem [shape: bf16[4,10,18,4], index: 0, kind: input, shape index: {}]
  %s1 = inlined_call_operand.vmem [shape: bf16[36,8], index: 1, kind: input, shape index: {}]
  %s2 = inlined_call_operand.vmem [shape: f32[1,8], index: 2, kind: input, shape index: {}]
  %s3 = inlined_call_operand.vmem [shape: bf16[8,128], index: 3, kind: input, shape index: {}]
  %s4 = inlined_call_operand.vmem [shape: f32[1,128], index: 4, kind: input, shape index: {}]
  %s5 = inlined_call_operand.vmem [shape: f32[2,16,16,128], index: 5, kind: output, shape index: {}]
  %s6 = sld [smem:[#allocation0]]
  $region53: #{segment_head_forward.1} parent=0
    _
  %s8 = ssub.s32 1, %s6
  %s9 = scalar_select 0, %s8, %s6
  loop: start=0, step=1, limit=6
  $region2: #{segment_head_forward.1} parent=0 // loop_pre_header
    _
  $region3: #{segment_head_forward.1} parent=0 // loop_header
    %s11 = sphi 0, %s15
    %p12 = scmp.ge.s32.totalorder %s11, 6
    %s18 = sphi 0, %s30
    %s19 = sphi 0, %s26
    %s20 = sphi 0, %s18
    %s21 = sphi 0, %s19
    %s22 = sphi 0, %s20
    %s23 = sphi 0, %s21
    %s37 = sphi 0, %s39
    %s40 = sphi 0, %s37
    %s41 = sphi 0, %s40
    %s57 = sphi 0, %s41
    %s61 = sphi 0, %s61
    %s63 = sphi 0, %s61
    %s64 = sphi 0, %s63
    %s78 = sphi 0, %s64
    %s82 = sphi 0, %s82
    %s84 = sphi 0, %s82
    %s85 = sphi 0, %s84
    %s99 = sphi 0, %s85
    %s103 = sphi 0, %s103
    %s105 = sphi 0, %s103
    %s106 = sphi 0, %s105
    %s120 = sphi 0, %s106
    %s124 = sphi 0, %s124
    %s126 = sphi 0, %s124
    %s127 = sphi 0, %s126
    %s141 = sphi 0, %s127
    %s149 = sphi 0, %s151
    %s152 = sphi 0, %s149
    %s153 = sphi 0, %s152
    %s169 = sphi 0, %s153
  $region4: #{segment_head_forward.1} parent=0 // loop_header_branch
    %14 = sbr.rel (%p12) target = $region8
  $region5: #{segment_head_forward.1} parent=0 // loop_body
    %s16 = ssub.s32 %s11, 1
    %s17 = ssub.s32 %s11, 2
    %s24 = sadd.s32 1, %s19
    %p25 = scmp.ge.s32.totalorder %s24, 2
    %s26 = scalar_select %p25, 0, %s24
    %s27 = sadd.s32 1, %s18
    %s28 = scalar_select %p25, %s27, %s18
    %p29 = scmp.ge.s32.totalorder %s28, 2
    %s30 = scalar_select %p29, 0, %s28
    %s31 = smul.u32 %s18, 2
    %s32 = sadd.s32 %s31, %s19
    %s33 = smul.u32 %s30, 2
    %s34 = sadd.s32 %s33, %s26
    %s35 = ssub.s32 %s32, %s34
    %p36 = scmp.eq.s32.totalorder %s35, 0
    %s38 = sadd.s32 %s37, 1
    %s39 = scalar_select %p36, %s37, %s38
    %p42 = pneg %p36
    %p43 = scmp.eq.s32.totalorder %s11, 3
    %p44 = por %p42, %p43
    %p45 = scmp.ne.s32.totalorder %s37, %s40
    %p46 = scmp.eq.s32.totalorder %s11, 0
    %p47 = por %p45, %p46
    %p48 = scmp.ne.s32.totalorder %s37, %s40
    %p49 = scmp.eq.s32.totalorder %s16, 3
    %p50 = por %p48, %p49
    %p51 = scmp.ne.s32.totalorder %s40, %s41
    %p52 = scmp.eq.s32.totalorder %s16, 0
    %p53 = por %p51, %p52
    %p54 = scmp.ne.s32.totalorder %s40, %s41
    %p55 = scmp.eq.s32.totalorder %s17, 3
    %p56 = por %p54, %p55
    %p58 = scmp.ne.s32.totalorder %s41, %s57
    %p59 = scmp.eq.s32.totalorder %s17, 0
    %p60 = por %p58, %p59
    %s62 = sadd.s32 %s61, 1
    %p65 = scmp.eq.s32.totalorder %s11, 3
    %p66 = scmp.ne.s32.totalorder %s61, %s63
    %p67 = scmp.eq.s32.totalorder %s11, 0
    %p68 = por %p66, %p67
    %p69 = scmp.ne.s32.totalorder %s61, %s63
    %p70 = scmp.eq.s32.totalorder %s16, 3
    %p71 = por %p69, %p70
    %p72 = scmp.ne.s32.totalorder %s63, %s64
    %p73 = scmp.eq.s32.totalorder %s16, 0
    %p74 = por %p72, %p73
    %p75 = scmp.ne.s32.totalorder %s63, %s64
    %p76 = scmp.eq.s32.totalorder %s17, 3
    %p77 = por %p75, %p76
    %p79 = scmp.ne.s32.totalorder %s64, %s78
    %p80 = scmp.eq.s32.totalorder %s17, 0
    %p81 = por %p79, %p80
    %s83 = sadd.s32 %s82, 1
    %p86 = scmp.eq.s32.totalorder %s11, 3
    %p87 = scmp.ne.s32.totalorder %s82, %s84
    %p88 = scmp.eq.s32.totalorder %s11, 0
    %p89 = por %p87, %p88
    %p90 = scmp.ne.s32.totalorder %s82, %s84
    %p91 = scmp.eq.s32.totalorder %s16, 3
    %p92 = por %p90, %p91
    %p93 = scmp.ne.s32.totalorder %s84, %s85
    %p94 = scmp.eq.s32.totalorder %s16, 0
    %p95 = por %p93, %p94
    %p96 = scmp.ne.s32.totalorder %s84, %s85
    %p97 = scmp.eq.s32.totalorder %s17, 3
    %p98 = por %p96, %p97
    %p100 = scmp.ne.s32.totalorder %s85, %s99
    %p101 = scmp.eq.s32.totalorder %s17, 0
    %p102 = por %p100, %p101
    %s104 = sadd.s32 %s103, 1
    %p107 = scmp.eq.s32.totalorder %s11, 3
    %p108 = scmp.ne.s32.totalorder %s103, %s105
    %p109 = scmp.eq.s32.totalorder %s11, 0
    %p110 = por %p108, %p109
    %p111 = scmp.ne.s32.totalorder %s103, %s105
    %p112 = scmp.eq.s32.totalorder %s16, 3
    %p113 = por %p111, %p112
    %p114 = scmp.ne.s32.totalorder %s105, %s106
    %p115 = scmp.eq.s32.totalorder %s16, 0
    %p116 = por %p114, %p115
    %p117 = scmp.ne.s32.totalorder %s105, %s106
    %p118 = scmp.eq.s32.totalorder %s17, 3
    %p119 = por %p117, %p118
    %p121 = scmp.ne.s32.totalorder %s106, %s120
    %p122 = scmp.eq.s32.totalorder %s17, 0
    %p123 = por %p121, %p122
    %s125 = sadd.s32 %s124, 1
    %p128 = scmp.eq.s32.totalorder %s11, 3
    %p129 = scmp.ne.s32.totalorder %s124, %s126
    %p130 = scmp.eq.s32.totalorder %s11, 0
    %p131 = por %p129, %p130
    %p132 = scmp.ne.s32.totalorder %s124, %s126
    %p133 = scmp.eq.s32.totalorder %s16, 3
    %p134 = por %p132, %p133
    %p135 = scmp.ne.s32.totalorder %s126, %s127
    %p136 = scmp.eq.s32.totalorder %s16, 0
    %p137 = por %p135, %p136
    %p138 = scmp.ne.s32.totalorder %s126, %s127
    %p139 = scmp.eq.s32.totalorder %s17, 3
    %p140 = por %p138, %p139
    %p142 = scmp.ne.s32.totalorder %s127, %s141
    %p143 = scmp.eq.s32.totalorder %s17, 0
    %p144 = por %p142, %p143
    %s145 = ssub.s32 %s18, %s30
    %s146 = ssub.s32 %s19, %s26
    %s147 = sor.u32 %s145, %s146
    %p148 = scmp.eq.s32.totalorder %s147, 0
    %s150 = sadd.s32 %s149, 1
    %s151 = scalar_select %p148, %s149, %s150
    %p154 = pneg %p148
    %p155 = scmp.eq.s32.totalorder %s11, 3
    %p156 = por %p154, %p155
    %p157 = scmp.ne.s32.totalorder %s149, %s152
    %p158 = scmp.eq.s32.totalorder %s11, 0
    %p159 = por %p157, %p158
    %p160 = scmp.ne.s32.totalorder %s149, %s152
    %p161 = scmp.eq.s32.totalorder %s16, 3
    %p162 = por %p160, %p161
    %p163 = scmp.ne.s32.totalorder %s152, %s153
    %p164 = scmp.eq.s32.totalorder %s16, 0
    %p165 = por %p163, %p164
    %p166 = scmp.ne.s32.totalorder %s152, %s153
    %p167 = scmp.eq.s32.totalorder %s17, 3
    %p168 = por %p166, %p167
    %p170 = scmp.ne.s32.totalorder %s153, %s169
    %p171 = scmp.eq.s32.totalorder %s17, 0
    %p172 = por %p170, %p171
    %p173 = scmp.le.s32.totalorder 1, %s11
    %p174 = scmp.lt.s32.totalorder %s11, 5
    %p175 = pnand %p173, %p174
    %p176 = pneg %p175
    // Predicated region
    $region9: #{segment_head_forward.1} parent=5 // pred_check
      _
    $region10: #{segment_head_forward.1} parent=5 // pred_check_branch
      %178 = sbr.rel (%p175) target = $region12
    $region11: #{segment_head_forward.1} parent=5 // pred_region
      %s179 = ssub.s32 %s11, 1
      // Predicated region
      $region13: #{segment_head_forward.1} parent=11 // pred_check
        %p180 = pneg %p74
      $region14: #{segment_head_forward.1} parent=11 // pred_check_branch
        %182 = sbr.rel (%p180) target = $region16
      $region15: #{segment_head_forward.1} parent=11 // pred_region
        _
      $region16: #{segment_head_forward.1} parent=11 // pred_fallthru
        _
      // Predicated region
      $region17: #{segment_head_forward.1} parent=11 // pred_check
        %p183 = pneg %p95
      $region18: #{segment_head_forward.1} parent=11 // pred_check_branch
        %185 = sbr.rel (%p183) target = $region20
      $region19: #{segment_head_forward.1} parent=11 // pred_region
        _
      $region20: #{segment_head_forward.1} parent=11 // pred_fallthru
        _
      // Predicated region
      $region21: #{segment_head_forward.1} parent=11 // pred_check
        %p186 = pneg %p116
      $region22: #{segment_head_forward.1} parent=11 // pred_check_branch
        %188 = sbr.rel (%p186) target = $region24
      $region23: #{segment_head_forward.1} parent=11 // pred_region
        _
      $region24: #{segment_head_forward.1} parent=11 // pred_fallthru
        _
      // Predicated region
      $region25: #{segment_head_forward.1} parent=11 // pred_check
        %p189 = pneg %p137
      $region26: #{segment_head_forward.1} parent=11 // pred_check_branch
        %191 = sbr.rel (%p189) target = $region28
      $region27: #{segment_head_forward.1} parent=11 // pred_region
        _
      $region28: #{segment_head_forward.1} parent=11 // pred_fallthru
        _
    $region12: #{segment_head_forward.1} parent=5 // pred_fallthru
      _
    %p192 = scmp.lt.s32.totalorder %s11, 4
    // Predicated region
    $region29: #{segment_head_forward.1} parent=5 // pred_check
      %p193 = pneg %p192
    $region30: #{segment_head_forward.1} parent=5 // pred_check_branch
      %195 = sbr.rel (%p193) target = $region32
    $region31: #{segment_head_forward.1} parent=5 // pred_region
      // Predicated region
      $region33: #{segment_head_forward.1} parent=31 // pred_check
        %p196 = pneg %p47
      $region34: #{segment_head_forward.1} parent=31 // pred_check_branch
        %198 = sbr.rel (%p196) target = $region36
      $region35: #{segment_head_forward.1} parent=31 // pred_region
        %s199 = smul.u32 %s18, 2
        %s200 = sadd.s32 %s199, %s19
        %p201 = scmp.lt.s32.totalorder %s200, 3
        %s202 = scalar_select %p201, %s200, 3
        %s203 = smul.addr %s202, 30
        %s204 = smul.addr %s203, 4
        %s205 = scalar_lea.vmem %s0, %s204
        %s206 = smul.u32 %s18, 2
        %s207 = sadd.s32 %s206, %s19
      $region36: #{segment_head_forward.1} parent=31 // pred_fallthru
        _
    $region32: #{segment_head_forward.1} parent=5 // pred_fallthru
      _
    %p208 = scmp.le.s32.totalorder 1, %s11
    %p209 = scmp.lt.s32.totalorder %s11, 5
    %p210 = pnand %p208, %p209
    %p211 = pneg %p210
    // Predicated region
    $region37: #{segment_head_forward.1} parent=5 // pred_check
      _
    $region38: #{segment_head_forward.1} parent=5 // pred_check_branch
      %213 = sbr.rel (%p210) target = $region40
    $region39: #{segment_head_forward.1} parent=5 // pred_region
      %s214 = ssub.s32 %s11, 1
      %s215 = smul.u32 %s20, 2
      %s216 = sadd.s32 %s215, %s21
      %p217 = scmp.lt.s32.totalorder %s216, 3
      %s218 = scalar_select %p217, %s216, 3
      %s219 = smul.addr %s218, 30
      %s220 = smul.addr %s219, 4
      %s221 = scalar_lea.vmem %s0, %s220
      %p222 = pneg %p53
      %p223 = pneg %p50
      %p224 = pneg %p74
      %p225 = pneg %p71
      %p226 = pneg %p95
      %p227 = pneg %p92
      %p228 = pneg %p116
      %p229 = pneg %p113
      %p230 = pneg %p137
      %p231 = pneg %p134
      %p232 = pneg %p165
      %p233 = pneg %p162
      %s234 = smul.u32 8, %s21
      %p235 = scmp.lt.s32.totalorder %s20, 1
      %s236 = scalar_select %p235, %s20, 1
      %p237 = scmp.lt.s32.totalorder %s234, 15
      %s238 = scalar_select %p237, %s234, 15
      %s239 = smul.addr %s238, 2
      %s240 = smul.addr %s236, 32
      %s241 = sadd.s32 %s239, %s240
      %s242 = smul.addr %s241, 8
      %s243 = scalar_lea.vmem %s5, %s242
      %s244 = smul.u32 %s20, 2
      %s245 = sadd.s32 %s244, %s21
      %p246 = scmp.lt.s32.totalorder %s245, 3
      %s247 = scalar_select %p246, %s245, 3
      %s248 = smul.addr %s247, 30
      %s249 = smul.addr %s248, 4
      %s250 = scalar_lea.vmem %s0, %s249
      %s251 = smul.u32 %s20, 2
      %s252 = sadd.s32 %s251, %s21
      %s253 = smul.u32 8, %s21
      %p254 = scmp.lt.s32.totalorder %s20, 1
      %s255 = scalar_select %p254, %s20, 1
      %p256 = scmp.lt.s32.totalorder %s253, 15
      %s257 = scalar_select %p256, %s253, 15
      %s258 = smul.addr %s257, 2
      %s259 = smul.addr %s255, 32
      %s260 = sadd.s32 %s258, %s259
      %s261 = smul.addr %s260, 8
      %s262 = scalar_lea.vmem %s5, %s261
      %s263 = smul.u32 8, %s21
      %v265 = vld [vmem:[%s250] sm:$0xf]
      %v266 = vld [vmem:[%s250 + $0x4] sm:$0xf]
      %v267 = vld [vmem:[%s250 + $0x8] sm:$0x1]
      %v268 = vld [vmem:[%s250 + $0xc] sm:$0xf]
      %v269 = vld [vmem:[%s250 + $0x10] sm:$0xf]
      %v270 = vld [vmem:[%s250 + $0x14] sm:$0x1]
      %v271 = vld [vmem:[%s250 + $0x18] sm:$0xf]
      %v272 = vld [vmem:[%s250 + $0x1c] sm:$0xf]
      %v273 = vld [vmem:[%s250 + $0x20] sm:$0x1]
      %v274 = vld [vmem:[%s250 + $0x24] sm:$0xf]
      %v275 = vld [vmem:[%s250 + $0x28] sm:$0xf]
      %v276 = vld [vmem:[%s250 + $0x2c] sm:$0x1]
      %v277 = vld [vmem:[%s250 + $0x30] sm:$0xf]
      %v278 = vld [vmem:[%s250 + $0x34] sm:$0xf]
      %v279 = vld [vmem:[%s250 + $0x38] sm:$0x1]
      %v280 = vld [vmem:[%s250 + $0x3c] sm:$0xf]
      %v281 = vld [vmem:[%s250 + $0x40] sm:$0xf]
      %v282 = vld [vmem:[%s250 + $0x44] sm:$0x1]
      %v283 = vld [vmem:[%s250 + $0x48] sm:$0xf]
      %v284 = vld [vmem:[%s250 + $0x4c] sm:$0xf]
      %v285 = vld [vmem:[%s250 + $0x50] sm:$0x1]
      %v286 = vld [vmem:[%s250 + $0x54] sm:$0xf]
      %v287 = vld [vmem:[%s250 + $0x58] sm:$0xf]
      %v288 = vld [vmem:[%s250 + $0x5c] sm:$0x1]
      %v289 = vld [vmem:[%s250 + $0x60] sm:$0xf]
      %v290 = vld [vmem:[%s250 + $0x64] sm:$0xf]
      %v291 = vld [vmem:[%s250 + $0x68] sm:$0x1]
      %v292 = vld [vmem:[%s250 + $0x6c] sm:$0xf]
      %v293 = vld [vmem:[%s250 + $0x70] sm:$0xf]
      %v294 = vld [vmem:[%s250 + $0x74] sm:$0x1]
      %v315 = vunpack.c.l.b16 %v265
      %v316 = vunpack.c.l.b16 %v266
      %v317 = vunpack.c.l.b16 %v268
      %v318 = vunpack.c.l.b16 %v269
      %v319 = vunpack.c.l.b16 %v271
      %v320 = vunpack.c.l.b16 %v272
      %v321 = vunpack.c.l.b16 %v274
      %v322 = vunpack.c.l.b16 %v275
      %v323 = vunpack.c.l.b16 %v277
      %v324 = vunpack.c.l.b16 %v278
      %v325 = vunpack.c.l.b16 %v280
      %v326 = vunpack.c.l.b16 %v281
      %v327 = vunpack.c.l.b16 %v283
      %v328 = vunpack.c.l.b16 %v284
      %v329 = vunpack.c.l.b16 %v286
      %v330 = vunpack.c.l.b16 %v287
      %v331 = vunpack.c.l.b16 %v289
      %v332 = vunpack.c.l.b16 %v290
      %v333 = vunpack.c.l.b16 %v292
      %v334 = vunpack.c.l.b16 %v293
      %v335 = vpack.c.b16 %v316, %v315
      %v336 = vpack.c.b16 %v318, %v317
      %v337 = vpack.c.b16 %v320, %v319
      %v338 = vpack.c.b16 %v322, %v321
      %v339 = vpack.c.b16 %v324, %v323
      %v340 = vpack.c.b16 %v326, %v325
      %v341 = vpack.c.b16 %v328, %v327
      %v342 = vpack.c.b16 %v330, %v329
      %v343 = vpack.c.b16 %v332, %v331
      %v344 = vpack.c.b16 %v334, %v333
      %v355 = vunpack.c.l.b16 %v267
      %v356 = vunpack.c.l.b16 %v270
      %v357 = vunpack.c.l.b16 %v273
      %v358 = vunpack.c.l.b16 %v276
      %v359 = vunpack.c.l.b16 %v279
      %v360 = vunpack.c.l.b16 %v282
      %v361 = vunpack.c.l.b16 %v285
      %v362 = vunpack.c.l.b16 %v288
      %v363 = vunpack.c.l.b16 %v291
      %v364 = vunpack.c.l.b16 %v294
      %v365 = vpack.c.b16 %v355, %v355
      %v366 = vpack.c.b16 %v356, %v356
      %v367 = vpack.c.b16 %v357, %v357
      %v368 = vpack.c.b16 %v358, %v358
      %v369 = vpack.c.b16 %v359, %v359
      %v370 = vpack.c.b16 %v360, %v360
      %v371 = vpack.c.b16 %v361, %v361
      %v372 = vpack.c.b16 %v362, %v362
      %v373 = vpack.c.b16 %v363, %v363
      %v374 = vpack.c.b16 %v364, %v364
      %vm375 = vsmask.f32 7424
      %v377 = vshrl.u32 %v335, 16
      %v379 = vshll.u32 %v335, 16
      %v381 = vrot.slane %v379, 1
      %v382 = vor.u32 %v377, %v381
      %v384 = vshll.u32 %v365, 16
      %v386 = vrot.slane %v384, 1
      %v387 = vsel %vm375, %v382, %v386
      %v389 = vshrl.u32 %v336, 16
      %v391 = vshll.u32 %v336, 16
      %v393 = vrot.slane %v391, 1
      %v394 = vor.u32 %v389, %v393
      %v396 = vshll.u32 %v366, 16
      %v398 = vrot.slane %v396, 1
      %v399 = vsel %vm375, %v394, %v398
      %v401 = vshrl.u32 %v337, 16
      %v403 = vshll.u32 %v337, 16
      %v405 = vrot.slane %v403, 1
      %v406 = vor.u32 %v401, %v405
      %v408 = vshll.u32 %v367, 16
      %v410 = vrot.slane %v408, 1
      %v411 = vsel %vm375, %v406, %v410
      %v413 = vshrl.u32 %v338, 16
      %v415 = vshll.u32 %v338, 16
      %v417 = vrot.slane %v415, 1
      %v418 = vor.u32 %v413, %v417
      %v420 = vshll.u32 %v368, 16
      %v422 = vrot.slane %v420, 1
      %v423 = vsel %vm375, %v418, %v422
      %v425 = vshrl.u32 %v339, 16
      %v427 = vshll.u32 %v339, 16
      %v429 = vrot.slane %v427, 1
      %v430 = vor.u32 %v425, %v429
      %v432 = vshll.u32 %v369, 16
      %v434 = vrot.slane %v432, 1
      %v435 = vsel %vm375, %v430, %v434
      %v437 = vshrl.u32 %v340, 16
      %v439 = vshll.u32 %v340, 16
      %v441 = vrot.slane %v439, 1
      %v442 = vor.u32 %v437, %v441
      %v444 = vshll.u32 %v370, 16
      %v446 = vrot.slane %v444, 1
      %v447 = vsel %vm375, %v442, %v446
      %v449 = vshrl.u32 %v341, 16
      %v451 = vshll.u32 %v341, 16
      %v453 = vrot.slane %v451, 1
      %v454 = vor.u32 %v449, %v453
      %v456 = vshll.u32 %v371, 16
      %v458 = vrot.slane %v456, 1
      %v459 = vsel %vm375, %v454, %v458
      %v461 = vshrl.u32 %v342, 16
      %v463 = vshll.u32 %v342, 16
      %v465 = vrot.slane %v463, 1
      %v466 = vor.u32 %v461, %v465
      %v468 = vshll.u32 %v372, 16
      %v470 = vrot.slane %v468, 1
      %v471 = vsel %vm375, %v466, %v470
      %v473 = vshrl.u32 %v343, 16
      %v475 = vshll.u32 %v343, 16
      %v477 = vrot.slane %v475, 1
      %v478 = vor.u32 %v473, %v477
      %v480 = vshll.u32 %v373, 16
      %v482 = vrot.slane %v480, 1
      %v483 = vsel %vm375, %v478, %v482
      %v485 = vshrl.u32 %v344, 16
      %v487 = vshll.u32 %v344, 16
      %v489 = vrot.slane %v487, 1
      %v490 = vor.u32 %v485, %v489
      %v492 = vshll.u32 %v374, 16
      %v494 = vrot.slane %v492, 1
      %v495 = vsel %vm375, %v490, %v494
      %496 = vrot.lane.b32.xlu0 %v387, 4
      %v497 = vpop.permute.xlu0 %496
      %498 = vrot.lane.b32.xlu0 %v399, 4
      %v499 = vpop.permute.xlu0 %498
      %500 = vrot.lane.b32.xlu0 %v411, 4
      %v501 = vpop.permute.xlu0 %500
      %502 = vrot.lane.b32.xlu0 %v423, 4
      %v503 = vpop.permute.xlu0 %502
      %504 = vrot.lane.b32.xlu0 %v435, 4
      %v505 = vpop.permute.xlu0 %504
      %506 = vrot.lane.b32.xlu0 %v447, 4
      %v507 = vpop.permute.xlu0 %506
      %508 = vrot.lane.b32.xlu0 %v459, 4
      %v509 = vpop.permute.xlu0 %508
      %510 = vrot.lane.b32.xlu0 %v471, 4
      %v511 = vpop.permute.xlu0 %510
      %512 = vrot.lane.b32.xlu0 %v483, 4
      %v513 = vpop.permute.xlu0 %512
      %514 = vrot.lane.b32.xlu0 %v495, 4
      %v515 = vpop.permute.xlu0 %514
      %vm516 = vcmask 1046528
      %v517 = vrot.slane %v335, 1
      %v518 = vrot.slane %v365, 1
      %v519 = vsel %vm516, %v517, %v518
      %v520 = vrot.slane %v336, 1
      %v521 = vrot.slane %v366, 1
      %v522 = vsel %vm516, %v520, %v521
      %v523 = vrot.slane %v337, 1
      %v524 = vrot.slane %v367, 1
      %v525 = vsel %vm516, %v523, %v524
      %v526 = vrot.slane %v338, 1
      %v527 = vrot.slane %v368, 1
      %v528 = vsel %vm516, %v526, %v527
      %v529 = vrot.slane %v339, 1
      %v530 = vrot.slane %v369, 1
      %v531 = vsel %vm516, %v529, %v530
      %v532 = vrot.slane %v340, 1
      %v533 = vrot.slane %v370, 1
      %v534 = vsel %vm516, %v532, %v533
      %v535 = vrot.slane %v341, 1
      %v536 = vrot.slane %v371, 1
      %v537 = vsel %vm516, %v535, %v536
      %v538 = vrot.slane %v342, 1
      %v539 = vrot.slane %v372, 1
      %v540 = vsel %vm516, %v538, %v539
      %v541 = vrot.slane %v343, 1
      %v542 = vrot.slane %v373, 1
      %v543 = vsel %vm516, %v541, %v542
      %v544 = vrot.slane %v344, 1
      %v545 = vrot.slane %v374, 1
      %v546 = vsel %vm516, %v544, %v545
      %547 = vrot.lane.b32.xlu0 %v519, 8
      %v548 = vpop.permute.xlu0 %547
      %549 = vrot.lane.b32.xlu0 %v522, 8
      %v550 = vpop.permute.xlu0 %549
      %551 = vrot.lane.b32.xlu0 %v525, 8
      %v552 = vpop.permute.xlu0 %551
      %553 = vrot.lane.b32.xlu0 %v528, 8
      %v554 = vpop.permute.xlu0 %553
      %555 = vrot.lane.b32.xlu0 %v531, 8
      %v556 = vpop.permute.xlu0 %555
      %557 = vrot.lane.b32.xlu0 %v534, 8
      %v558 = vpop.permute.xlu0 %557
      %559 = vrot.lane.b32.xlu0 %v537, 8
      %v560 = vpop.permute.xlu0 %559
      %561 = vrot.lane.b32.xlu0 %v540, 8
      %v562 = vpop.permute.xlu0 %561
      %563 = vrot.lane.b32.xlu0 %v543, 8
      %v564 = vpop.permute.xlu0 %563
      %565 = vrot.lane.b32.xlu0 %v546, 8
      %v566 = vpop.permute.xlu0 %565
      %vm567 = vcmask 31744
      %v569 = vsel %vm567, %v335, %v497
      %v571 = vsel %vm567, %v336, %v499
      %v573 = vsel %vm567, %v337, %v501
      %v575 = vsel %vm567, %v338, %v503
      %v577 = vsel %vm567, %v339, %v505
      %v579 = vsel %vm567, %v340, %v507
      %v581 = vsel %vm567, %v341, %v509
      %v583 = vsel %vm567, %v342, %v511
      %v585 = vsel %vm567, %v343, %v513
      %v587 = vsel %vm567, %v344, %v515
      %vm588 = vcmask 64512
      %v590 = vsel %vm588, %v569, %v548
      %v592 = vsel %vm588, %v571, %v550
      %v594 = vsel %vm588, %v573, %v552
      %v596 = vsel %vm588, %v575, %v554
      %v598 = vsel %vm588, %v577, %v556
      %v600 = vsel %vm588, %v579, %v558
      %v602 = vsel %vm588, %v581, %v560
      %v604 = vsel %vm588, %v583, %v562
      %v606 = vsel %vm588, %v585, %v564
      %v608 = vsel %vm588, %v587, %v566
      %617 = vrot.lane.b32.xlu0 %v592, 12
      %v618 = vpop.permute.xlu0 %617
      %619 = vrot.lane.b32.xlu0 %v594, 12
      %v620 = vpop.permute.xlu0 %619
      %621 = vrot.lane.b32.xlu0 %v596, 12
      %v622 = vpop.permute.xlu0 %621
      %623 = vrot.lane.b32.xlu0 %v598, 12
      %v624 = vpop.permute.xlu0 %623
      %625 = vrot.lane.b32.xlu0 %v600, 12
      %v626 = vpop.permute.xlu0 %625
      %627 = vrot.lane.b32.xlu0 %v602, 12
      %v628 = vpop.permute.xlu0 %627
      %629 = vrot.lane.b32.xlu0 %v604, 12
      %v630 = vpop.permute.xlu0 %629
      %631 = vrot.lane.b32.xlu0 %v606, 12
      %v632 = vpop.permute.xlu0 %631
      %634 = vrot.lane.b32.xlu0 %v594, 24
      %v635 = vpop.permute.xlu0 %634
      %636 = vrot.lane.b32.xlu0 %v596, 24
      %v637 = vpop.permute.xlu0 %636
      %638 = vrot.lane.b32.xlu0 %v598, 24
      %v639 = vpop.permute.xlu0 %638
      %640 = vrot.lane.b32.xlu0 %v600, 24
      %v641 = vpop.permute.xlu0 %640
      %642 = vrot.lane.b32.xlu0 %v602, 24
      %v643 = vpop.permute.xlu0 %642
      %644 = vrot.lane.b32.xlu0 %v604, 24
      %v645 = vpop.permute.xlu0 %644
      %646 = vrot.lane.b32.xlu0 %v606, 24
      %v647 = vpop.permute.xlu0 %646
      %648 = vrot.lane.b32.xlu0 %v608, 24
      %v649 = vpop.permute.xlu0 %648
      %vm650 = vcmask 97280
      %v652 = vsel %vm650, %v590, %v618
      %v654 = vsel %vm650, %v592, %v620
      %v656 = vsel %vm650, %v594, %v622
      %v658 = vsel %vm650, %v596, %v624
      %v660 = vsel %vm650, %v598, %v626
      %v662 = vsel %vm650, %v600, %v628
      %v664 = vsel %vm650, %v602, %v630
      %v666 = vsel %vm650, %v604, %v632
      %vm667 = vcmask 195584
      %v669 = vsel %vm667, %v652, %v635
      %v671 = vsel %vm667, %v654, %v637
      %v673 = vsel %vm667, %v656, %v639
      %v675 = vsel %vm667, %v658, %v641
      %v677 = vsel %vm667, %v660, %v643
      %v679 = vsel %vm667, %v662, %v645
      %v681 = vsel %vm667, %v664, %v647
      %v683 = vsel %vm667, %v666, %v649
      %v684 = vld [vmem:[%s1] sm:$0xf]
      %v685 = vld [vmem:[%s1 + $0x4] sm:$0xf]
      %v686 = vld [vmem:[%s1 + $0x8] sm:$0xf]
      %v687 = vld [vmem:[%s1 + $0xc] sm:$0xf]
      %v688 = vld [vmem:[%s1 + $0x10] sm:$0x3]
      %v689 = vld [vmem:[%s2] sm:$0x1]
      %v691 = vperm.slane %v689, 0
      %v698 = vunpack.c.l.b16 %v684
      %v699 = vunpack.c.l.b16 %v685
      %v700 = vunpack.c.l.b16 %v686
      %v701 = vunpack.c.l.b16 %v687
      %v702 = vunpack.c.l.b16 %v688
      %v703 = vpack.c.b16 %v699, %v698
      %v704 = vpack.c.b16 %v701, %v700
      %v705 = vpack.c.b16 %v702, %v702
      %vm708 = vcmask 293888
      %v709 = vsel %vm708, %v669, 0
      %v711 = vsel %vm708, %v671, 0
      %v713 = vsel %vm708, %v673, 0
      %v715 = vsel %vm708, %v675, 0
      %v717 = vsel %vm708, %v677, 0
      %v719 = vsel %vm708, %v679, 0
      %v721 = vsel %vm708, %v681, 0
      %v723 = vsel %vm708, %v683, 0
      %vm725 = vcmask 1041408
      %v727 = vsel %vm725, %v705, 0
      %729 = vmatpush.bf16.msra.mxu0 0
      %730 = vmatpush.bf16.msra.mxu0 0
      %731 = vmatpush.bf16.msra.mxu0 0
      %732 = vmatpush.bf16.msra.mxu0 0
      %733 = vmatpush.bf16.msra.mxu0 0
      %734 = vmatpush.bf16.msra.mxu0 %v727
      %735 = vmatpush.bf16.msra.mxu0 %v704
      %736 = vmatpush.bf16.msra.mxu0 %v703
      %737 = vmatmul.bf16.gmra.mxu0 %v709
      %v738 = vpop.f32.mrf.mxu0
      %v739 = vadd.f32 %v691, %v738
      %v740 = vpop.f32.mrf.mxu0
      %v741 = vadd.f32 %v691, %v740
      %742 = vmatmul.bf16.gmra.mxu0 %v711
      %v743 = vpop.f32.mrf.mxu0
      %v744 = vadd.f32 %v691, %v743
      %v745 = vpop.f32.mrf.mxu0
      %v746 = vadd.f32 %v691, %v745
      %747 = vmatmul.bf16.gmra.mxu0 %v713
      %v748 = vpop.f32.mrf.mxu0
      %v749 = vadd.f32 %v691, %v748
      %v750 = vpop.f32.mrf.mxu0
      %v751 = vadd.f32 %v691, %v750
      %752 = vmatmul.bf16.gmra.mxu0 %v715
      %v753 = vpop.f32.mrf.mxu0
      %v754 = vadd.f32 %v691, %v753
      %v755 = vpop.f32.mrf.mxu0
      %v756 = vadd.f32 %v691, %v755
      %757 = vmatmul.bf16.gmra.mxu0 %v717
      %v758 = vpop.f32.mrf.mxu0
      %v759 = vadd.f32 %v691, %v758
      %v760 = vpop.f32.mrf.mxu0
      %v761 = vadd.f32 %v691, %v760
      %762 = vmatmul.bf16.gmra.mxu0 %v719
      %v763 = vpop.f32.mrf.mxu0
      %v764 = vadd.f32 %v691, %v763
      %v765 = vpop.f32.mrf.mxu0
      %v766 = vadd.f32 %v691, %v765
      %767 = vmatmul.bf16.gmra.mxu0 %v721
      %v768 = vpop.f32.mrf.mxu0
      %v769 = vadd.f32 %v691, %v768
      %v770 = vpop.f32.mrf.mxu0
      %v771 = vadd.f32 %v691, %v770
      %772 = vmatmul.bf16.gmra.mxu0 %v723
      %v773 = vpop.f32.mrf.mxu0
      %v774 = vadd.f32 %v691, %v773
      %v775 = vpop.f32.mrf.mxu0
      %v776 = vadd.f32 %v691, %v775
      %777 = vdwg.mxu0
      %v778 = vmax.f32 %v739, 0.0
      %v779 = vmax.f32 %v741, 0.0
      %v780 = vmax.f32 %v744, 0.0
      %v781 = vmax.f32 %v746, 0.0
      %v782 = vmax.f32 %v749, 0.0
      %v783 = vmax.f32 %v751, 0.0
      %v784 = vmax.f32 %v754, 0.0
      %v785 = vmax.f32 %v756, 0.0
      %v786 = vmax.f32 %v759, 0.0
      %v787 = vmax.f32 %v761, 0.0
      %v788 = vmax.f32 %v764, 0.0
      %v789 = vmax.f32 %v766, 0.0
      %v790 = vmax.f32 %v769, 0.0
      %v791 = vmax.f32 %v771, 0.0
      %v792 = vmax.f32 %v774, 0.0
      %v793 = vmax.f32 %v776, 0.0
      %v794 = vpack.c.bf16 %v779, %v778
      %v795 = vpack.c.bf16 %v781, %v780
      %v796 = vpack.c.bf16 %v783, %v782
      %v797 = vpack.c.bf16 %v785, %v784
      %v798 = vpack.c.bf16 %v787, %v786
      %v799 = vpack.c.bf16 %v789, %v788
      %v800 = vpack.c.bf16 %v791, %v790
      %v801 = vpack.c.bf16 %v793, %v792
      %v802 = vld [vmem:[%s3] sm:$0xf]
      %v803 = vld [vmem:[%s4] sm:$0x1]
      %v805 = vperm.slane %v803, 0
      %v808 = vsel %vm588, %v794, 0
      %v811 = vsel %vm588, %v795, 0
      %v814 = vsel %vm588, %v796, 0
      %v817 = vsel %vm588, %v797, 0
      %v820 = vsel %vm588, %v798, 0
      %v823 = vsel %vm588, %v799, 0
      %v826 = vsel %vm588, %v800, 0
      %v829 = vsel %vm588, %v801, 0
      %vm831 = vcmask 1043456
      %v833 = vsel %vm831, %v802, 0
      %835 = vmatpush.bf16.msra.mxu0 0
      %836 = vmatpush.bf16.msra.mxu0 0
      %837 = vmatpush.bf16.msra.mxu0 0
      %838 = vmatpush.bf16.msra.mxu0 0
      %839 = vmatpush.bf16.msra.mxu0 0
      %840 = vmatpush.bf16.msra.mxu0 0
      %841 = vmatpush.bf16.msra.mxu0 0
      %842 = vmatpush.bf16.msra.mxu0 %v833
      %843 = vmatmul.bf16.gmra.mxu0 %v808
      %v844 = vpop.f32.mrf.mxu0
      %v845 = vadd.f32 %v805, %v844
      %v846 = vpop.f32.mrf.mxu0
      %v847 = vadd.f32 %v805, %v846
      %848 = vmatmul.bf16.gmra.mxu0 %v811
      %v849 = vpop.f32.mrf.mxu0
      %v850 = vadd.f32 %v805, %v849
      %v851 = vpop.f32.mrf.mxu0
      %v852 = vadd.f32 %v805, %v851
      %853 = vmatmul.bf16.gmra.mxu0 %v814
      %v854 = vpop.f32.mrf.mxu0
      %v855 = vadd.f32 %v805, %v854
      %v856 = vpop.f32.mrf.mxu0
      %v857 = vadd.f32 %v805, %v856
      %858 = vmatmul.bf16.gmra.mxu0 %v817
      %v859 = vpop.f32.mrf.mxu0
      %v860 = vadd.f32 %v805, %v859
      %v861 = vpop.f32.mrf.mxu0
      %v862 = vadd.f32 %v805, %v861
      %863 = vmatmul.bf16.gmra.mxu0 %v820
      %v864 = vpop.f32.mrf.mxu0
      %v865 = vadd.f32 %v805, %v864
      %v866 = vpop.f32.mrf.mxu0
      %v867 = vadd.f32 %v805, %v866
      %868 = vmatmul.bf16.gmra.mxu0 %v823
      %v869 = vpop.f32.mrf.mxu0
      %v870 = vadd.f32 %v805, %v869
      %v871 = vpop.f32.mrf.mxu0
      %v872 = vadd.f32 %v805, %v871
      %873 = vmatmul.bf16.gmra.mxu0 %v826
      %v874 = vpop.f32.mrf.mxu0
      %v875 = vadd.f32 %v805, %v874
      %v876 = vpop.f32.mrf.mxu0
      %v877 = vadd.f32 %v805, %v876
      %878 = vmatmul.bf16.gmra.mxu0 %v829
      %v879 = vpop.f32.mrf.mxu0
      %v880 = vadd.f32 %v805, %v879
      %v881 = vpop.f32.mrf.mxu0
      %v882 = vadd.f32 %v805, %v881
      %883 = vdwg.mxu0
      %884 = vst [vmem:[%s262] sm:$0xff] %v845
      %885 = vst [vmem:[%s262 + $0x8] sm:$0xff] %v847
      %886 = vst [vmem:[%s262 + $0x10] sm:$0xff] %v850
      %887 = vst [vmem:[%s262 + $0x18] sm:$0xff] %v852
      %888 = vst [vmem:[%s262 + $0x20] sm:$0xff] %v855
      %889 = vst [vmem:[%s262 + $0x28] sm:$0xff] %v857
      %890 = vst [vmem:[%s262 + $0x30] sm:$0xff] %v860
      %891 = vst [vmem:[%s262 + $0x38] sm:$0xff] %v862
      %892 = vst [vmem:[%s262 + $0x40] sm:$0xff] %v865
      %893 = vst [vmem:[%s262 + $0x48] sm:$0xff] %v867
      %894 = vst [vmem:[%s262 + $0x50] sm:$0xff] %v870
      %895 = vst [vmem:[%s262 + $0x58] sm:$0xff] %v872
      %896 = vst [vmem:[%s262 + $0x60] sm:$0xff] %v875
      %897 = vst [vmem:[%s262 + $0x68] sm:$0xff] %v877
      %898 = vst [vmem:[%s262 + $0x70] sm:$0xff] %v880
      %899 = vst [vmem:[%s262 + $0x78] sm:$0xff] %v882
      %s900 = smul.u32 8, %s21
      %p901 = scmp.lt.s32.totalorder %s20, 1
      %s902 = scalar_select %p901, %s20, 1
      %p903 = scmp.lt.s32.totalorder %s900, 15
      %s904 = scalar_select %p903, %s900, 15
      %s905 = smul.addr %s904, 2
      %s906 = smul.addr %s902, 32
      %s907 = sadd.s32 %s905, %s906
      %s908 = smul.addr %s907, 8
      %s909 = scalar_lea.vmem %s5, %s908
      // Predicated region
      $region41: #{segment_head_forward.1} parent=39 // pred_check
        %p910 = pneg %p162
      $region42: #{segment_head_forward.1} parent=39 // pred_check_branch
        %912 = sbr.rel (%p910) target = $region44
      $region43: #{segment_head_forward.1} parent=39 // pred_region
        %s913 = smul.u32 8, %s21
      $region44: #{segment_head_forward.1} parent=39 // pred_fallthru
        _
    $region40: #{segment_head_forward.1} parent=5 // pred_fallthru
      _
    %p914 = scmp.le.s32.totalorder 2, %s11
    // Predicated region
    $region45: #{segment_head_forward.1} parent=5 // pred_check
      %p915 = pneg %p914
    $region46: #{segment_head_forward.1} parent=5 // pred_check_branch
      %917 = sbr.rel (%p915) target = $region48
    $region47: #{segment_head_forward.1} parent=5 // pred_region
      %s918 = ssub.s32 %s11, 2
      // Predicated region
      $region49: #{segment_head_forward.1} parent=47 // pred_check
        %p919 = pneg %p168
      $region50: #{segment_head_forward.1} parent=47 // pred_check_branch
        %921 = sbr.rel (%p919) target = $region52
      $region51: #{segment_head_forward.1} parent=47 // pred_region
        %s922 = smul.u32 8, %s23
        %p923 = scmp.lt.s32.totalorder %s22, 1
        %s924 = scalar_select %p923, %s22, 1
        %p925 = scmp.lt.s32.totalorder %s922, 15
        %s926 = scalar_select %p925, %s922, 15
        %s927 = smul.addr %s926, 2
        %s928 = smul.addr %s924, 32
        %s929 = sadd.s32 %s927, %s928
        %s930 = smul.addr %s929, 8
        %s931 = scalar_lea.vmem %s5, %s930
      $region52: #{segment_head_forward.1} parent=47 // pred_fallthru
        _
    $region48: #{segment_head_forward.1} parent=5 // pred_fallthru
      _
  $region6: #{segment_head_forward.1} parent=0 // loop_footer
    %s15 = sadd.s32 1, %s11
  $region7: #{segment_head_forward.1} parent=0 // loop_footer_branch
    %10 = sbr.rel target = $region3
  $region8: #{segment_head_forward.1} parent=0 // loop_exit
    _

</llo_original>
